<compile_context>
chip_gen: v7x
topology: tpu7x:2x2x1
jax: 0.10.0
libtpu: 0.0.40
codegen_flags: <defaults>
</compile_context>

<pallas_src>
import jax
import jax.numpy as jnp
from jax.experimental import pallas as pl
from jax.experimental.pallas import tpu as pltpu

NEG_SLOPE = 0.01   # nn.LeakyReLU default
K_IN = 784         # 28*28
N1 = 256
N2 = 64
TB = 256           # fixed batch tile: bounded padding waste, multi-step grid


def _round_up(a, b):
    return (a + b - 1) // b * b


def mlp_kernel(x_ref, w1_ref, b1_ref, w2_ref, b2_ref, o_ref):
    # x: (tb, 784) f32, w1: (784, 256) bf16, w2: (256, 64) bf16,
    # b1: (1, 256) f32, b2: (1, 64) f32, out: (tb, 64) f32.
    x = x_ref[...].astype(jnp.bfloat16)   # cast in VMEM, not in HBM

    # fc1 (bf16 MXU, f32 accumulate) + bias + LeakyReLU
    h1 = jnp.dot(x, w1_ref[...], preferred_element_type=jnp.float32)
    h1 = h1 + b1_ref[...]
    h1 = jnp.maximum(h1, NEG_SLOPE * h1)
    # TODO(synk): Dropout(p=0.2) is identity here (eval-mode semantics);
    # training-mode stochastic masking would use pltpu.prng_* but cannot
    # bit-match torch's RNG anyway.

    # fc2 (bf16 MXU, f32 accumulate) + bias + LeakyReLU
    h2 = jnp.dot(h1.astype(jnp.bfloat16), w2_ref[...],
                 preferred_element_type=jnp.float32)
    h2 = h2 + b2_ref[...]
    h2 = jnp.maximum(h2, NEG_SLOPE * h2)

    # Numerically-stable LogSoftmax over the feature axis (dim=1)
    m = jnp.max(h2, axis=1, keepdims=True)
    s = h2 - m
    lse = jnp.log(jnp.sum(jnp.exp(s), axis=1, keepdims=True))
    o_ref[...] = (s - lse).astype(o_ref.dtype)


@jax.jit
def mlp_forward(x_nchw, w1_bf, b1_f, w2_bf, b2_f):
    """x_nchw: (B, 1, 28, 28) f32; weights pre-prepared via prepare_params."""
    B = x_nchw.shape[0]
    x = x_nchw.reshape(B, -1).astype(jnp.float32)   # (B, 784), like .view()

    # Fixed small tile => padding waste bounded by TB, multi-step grid for
    # pipelining / v7x megacore sharding. 16-row alignment keeps bf16 sublane
    # packing clean after the in-kernel cast.
    tb = min(TB, _round_up(B, 16))
    b_pad = _round_up(B, tb)
    if b_pad != B:
        x = jnp.pad(x, ((0, b_pad - B), (0, 0)))    # zero rows, sliced off later
    grid = (b_pad // tb,)

    cost = pl.CostEstimate(
        flops=2 * b_pad * (K_IN * N1 + N1 * N2),
        transcendentals=b_pad * N2,
        bytes_accessed=(b_pad * K_IN * 4          # x stream (f32, once)
                        + K_IN * N1 * 2 + N1 * N2 * 2   # resident bf16 weights
                        + N1 * 4 + N2 * 4               # biases
                        + b_pad * N2 * 4),              # output
    )

    out = pl.pallas_call(
        mlp_kernel,
        out_shape=jax.ShapeDtypeStruct((b_pad, N2), jnp.float32),
        grid_spec=pltpu.PrefetchScalarGridSpec(
            num_scalar_prefetch=0,
            grid=grid,
            in_specs=[
                pl.BlockSpec((tb, K_IN), lambda i: (i, 0)),   # x: streamed
                pl.BlockSpec((K_IN, N1), lambda i: (0, 0)),   # W1: resident
                pl.BlockSpec((1, N1), lambda i: (0, 0)),      # b1: resident
                pl.BlockSpec((N1, N2), lambda i: (0, 0)),     # W2: resident
                pl.BlockSpec((1, N2), lambda i: (0, 0)),      # b2: resident
            ],
            out_specs=pl.BlockSpec((tb, N2), lambda i: (i, 0)),
        ),
        compiler_params=pltpu.CompilerParams(
            dimension_semantics=("parallel",),
        ),
        cost_estimate=cost,
    )(x, w1_bf, b1_f, w2_bf, b2_f)

    return out[:B]


def prepare_params(w1, b1, w2, b2):
    """One-time (outside jit'd forward) weight prep: bf16 cast + bias reshape."""
    return (w1.astype(jnp.bfloat16),
            b1.astype(jnp.float32).reshape(1, N1),
            w2.astype(jnp.bfloat16),
            b2.astype(jnp.float32).reshape(1, N2))


def init_params(key):
    """Deterministic parameter init (PyTorch-style uniform fan-in bounds)."""
    k1, k2, k3, k4 = jax.random.split(key, 4)
    bound1 = 1.0 / jnp.sqrt(784.0)
    bound2 = 1.0 / jnp.sqrt(256.0)
    # Stored transposed vs. torch: (in_features, out_features)
    w1 = jax.random.uniform(k1, (K_IN, N1), jnp.float32, -bound1, bound1)
    b1 = jax.random.uniform(k2, (N1,), jnp.float32, -bound1, bound1)
    w2 = jax.random.uniform(k3, (N1, N2), jnp.float32, -bound2, bound2)
    b2 = jax.random.uniform(k4, (N2,), jnp.float32, -bound2, bound2)
    return w1, b1, w2, b2


def mlp_reference(x_nchw, w1, b1, w2, b2):
    """Pure-JAX f32 reference of the same forward (eval-mode dropout)."""
    x = x_nchw.reshape(x_nchw.shape[0], -1)
    h1 = x @ w1 + b1
    h1 = jnp.where(h1 > 0, h1, NEG_SLOPE * h1)
    h2 = h1 @ w2 + b2
    h2 = jnp.where(h2 > 0, h2, NEG_SLOPE * h2)
    return jax.nn.log_softmax(h2, axis=1)


if __name__ == "__main__":
    key = jax.random.PRNGKey(0)
    kx, kp = jax.random.split(key)

    # Small MNIST-like input: batch=2, NCHW (2, 1, 28, 28)
    x = jax.random.normal(kx, (2, 1, 28, 28), dtype=jnp.float32)
    w1, b1, w2, b2 = init_params(kp)
    w1_bf, b1_f, w2_bf, b2_f = prepare_params(w1, b1, w2, b2)

    out = mlp_forward(x, w1_bf, b1_f, w2_bf, b2_f)
    out = jax.block_until_ready(out)

    assert out.shape == (2, 64)

    # Sanity 1: log-softmax rows should sum to ~1 after exp
    row_sums = jnp.exp(out).sum(axis=1)
    assert jnp.allclose(row_sums, jnp.ones_like(row_sums), atol=1e-4)

    # Sanity 2: match the f32 pure-JAX reference (bf16-matmul tolerance)
    ref = mlp_reference(x, w1, b1, w2, b2)
    assert jnp.max(jnp.abs(out - ref)) < 5e-2

    print("KERNEL_OK")
</pallas_src>

<mosaic_0001>
module attributes {stable_mosaic.version = 11 : i64} {
  func.func @mlp_kernel(%arg0: i32, %arg1: memref<16x784xf32, #tpu.memory_space<vmem>>, %arg2: memref<784x256xbf16, #tpu.memory_space<vmem>>, %arg3: memref<1x256xf32, #tpu.memory_space<vmem>>, %arg4: memref<256x64xbf16, #tpu.memory_space<vmem>>, %arg5: memref<1x64xf32, #tpu.memory_space<vmem>>, %arg6: memref<16x64xf32, #tpu.memory_space<vmem>>) attributes {dimension_semantics = [#tpu.dimension_semantics<parallel>], iteration_bounds = array<i64: 1>, scalar_prefetch = 0 : i64, scratch_operands = 0 : i64, tpu.core_type = #tpu.core_type<tc>, window_params = [{transform_indices = @transform_0, window_bounds = array<i64: 16, 784>}, {pipeline_mode = #tpu.pipeline_mode<synchronous>, transform_indices = @transform_1, window_bounds = array<i64: 784, 256>}, {pipeline_mode = #tpu.pipeline_mode<synchronous>, transform_indices = @transform_2, window_bounds = array<i64: 1, 256>}, {pipeline_mode = #tpu.pipeline_mode<synchronous>, transform_indices = @transform_3, window_bounds = array<i64: 256, 64>}, {pipeline_mode = #tpu.pipeline_mode<synchronous>, transform_indices = @transform_4, window_bounds = array<i64: 1, 64>}, {transform_indices = @transform_5, window_bounds = array<i64: 16, 64>}]} {
    %c0 = arith.constant 0 : index
    %c0_0 = arith.constant 0 : index
    %0 = vector.load %arg1[%c0, %c0_0] : memref<16x784xf32, #tpu.memory_space<vmem>>, vector<16x784xf32>
    %1 = arith.truncf %0 : vector<16x784xf32> to vector<16x784xbf16>
    %c0_1 = arith.constant 0 : index
    %c0_2 = arith.constant 0 : index
    %2 = vector.load %arg2[%c0_1, %c0_2] : memref<784x256xbf16, #tpu.memory_space<vmem>>, vector<784x256xbf16>
    %cst = arith.constant dense<0.000000e+00> : vector<16x256xf32>
    %3 = tpu.matmul %1, %2, %cst {dimension_numbers = #tpu.dot_dimension_numbers<[1], [0], [0], [1], [0, 0, 1, 1], [], []>} : vector<16x784xbf16>, vector<784x256xbf16>, vector<16x256xf32> -> vector<16x256xf32>
    %c0_3 = arith.constant 0 : index
    %c0_4 = arith.constant 0 : index
    %4 = vector.load %arg3[%c0_3, %c0_4] : memref<1x256xf32, #tpu.memory_space<vmem>>, vector<1x256xf32>
    %5 = vector.broadcast %4 : vector<1x256xf32> to vector<16x256xf32>
    %6 = arith.addf %3, %5 : vector<16x256xf32>
    %cst_5 = arith.constant 0.00999999977 : f32
    %7 = vector.broadcast %cst_5 : f32 to vector<16x256xf32>
    %8 = arith.mulf %7, %6 : vector<16x256xf32>
    %9 = arith.maximumf %6, %8 : vector<16x256xf32>
    %10 = arith.truncf %9 : vector<16x256xf32> to vector<16x256xbf16>
    %c0_6 = arith.constant 0 : index
    %c0_7 = arith.constant 0 : index
    %11 = vector.load %arg4[%c0_6, %c0_7] : memref<256x64xbf16, #tpu.memory_space<vmem>>, vector<256x64xbf16>
    %cst_8 = arith.constant dense<0.000000e+00> : vector<16x64xf32>
    %12 = tpu.matmul %10, %11, %cst_8 {dimension_numbers = #tpu.dot_dimension_numbers<[1], [0], [0], [1], [0, 0, 1, 1], [], []>} : vector<16x256xbf16>, vector<256x64xbf16>, vector<16x64xf32> -> vector<16x64xf32>
    %c0_9 = arith.constant 0 : index
    %c0_10 = arith.constant 0 : index
    %13 = vector.load %arg5[%c0_9, %c0_10] : memref<1x64xf32, #tpu.memory_space<vmem>>, vector<1x64xf32>
    %14 = vector.broadcast %13 : vector<1x64xf32> to vector<16x64xf32>
    %15 = arith.addf %12, %14 : vector<16x64xf32>
    %cst_11 = arith.constant 0.00999999977 : f32
    %16 = vector.broadcast %cst_11 : f32 to vector<16x64xf32>
    %17 = arith.mulf %16, %15 : vector<16x64xf32>
    %18 = arith.maximumf %15, %17 : vector<16x64xf32>
    %cst_12 = arith.constant dense<0xFF800000> : vector<16xf32>
    %19 = vector.multi_reduction <maximumf>, %18, %cst_12 [1] : vector<16x64xf32> to vector<16xf32>
    %20 = vector.shape_cast %19 : vector<16xf32> to vector<16x1xf32>
    %21 = vector.broadcast %20 : vector<16x1xf32> to vector<16x64xf32>
    %22 = arith.subf %18, %21 : vector<16x64xf32>
    %23 = math.exp %22 : vector<16x64xf32>
    %cst_13 = arith.constant dense<0.000000e+00> : vector<16xf32>
    %24 = vector.multi_reduction <add>, %23, %cst_13 [1] : vector<16x64xf32> to vector<16xf32>
    %25 = vector.shape_cast %24 : vector<16xf32> to vector<16x1xf32>
    %26 = math.log %25 : vector<16x1xf32>
    %27 = vector.broadcast %26 : vector<16x1xf32> to vector<16x64xf32>
    %28 = arith.subf %22, %27 : vector<16x64xf32>
    %c0_14 = arith.constant 0 : index
    %c0_15 = arith.constant 0 : index
    %29 = vector.load %arg6[%c0_14, %c0_15] : memref<16x64xf32, #tpu.memory_space<vmem>>, vector<16x64xf32>
    tpu.vector_store %arg6[%c0_14, %c0_15], %28 {strides = array<i32>} : memref<16x64xf32, #tpu.memory_space<vmem>>, vector<16x64xf32>,
    return
  }
  func.func @transform_0(%arg0: i32) -> (i32, i32) {
    %c0_i32 = arith.constant 0 : i32
    %c0_i32_0 = arith.constant 0 : i32
    return %arg0, %c0_i32 : i32, i32
  }
  func.func @transform_1(%arg0: i32) -> (i32, i32) {
    %c0_i32 = arith.constant 0 : i32
    %c0_i32_0 = arith.constant 0 : i32
    %c0_i32_1 = arith.constant 0 : i32
    return %c0_i32, %c0_i32_0 : i32, i32
  }
  func.func @transform_2(%arg0: i32) -> (i32, i32) {
    %c0_i32 = arith.constant 0 : i32
    %c0_i32_0 = arith.constant 0 : i32
    %c0_i32_1 = arith.constant 0 : i32
    return %c0_i32, %c0_i32_0 : i32, i32
  }
  func.func @transform_3(%arg0: i32) -> (i32, i32) {
    %c0_i32 = arith.constant 0 : i32
    %c0_i32_0 = arith.constant 0 : i32
    %c0_i32_1 = arith.constant 0 : i32
    return %c0_i32, %c0_i32_0 : i32, i32
  }
  func.func @transform_4(%arg0: i32) -> (i32, i32) {
    %c0_i32 = arith.constant 0 : i32
    %c0_i32_0 = arith.constant 0 : i32
    %c0_i32_1 = arith.constant 0 : i32
    return %c0_i32, %c0_i32_0 : i32, i32
  }
  func.func @transform_5(%arg0: i32) -> (i32, i32) {
    %c0_i32 = arith.constant 0 : i32
    %c0_i32_0 = arith.constant 0 : i32
    return %arg0, %c0_i32 : i32, i32
  }
}

</mosaic_0001>

<llo_original>
// kernel: mlp_forward.1
$region0: #{mlp_forward.1}
  #allocation0 [shape = 'u32[]', space=smem, size = 0x4, offset = 0x4, fixed_abs, tag = 'smem constant byte address 0x4 - core index']
  #allocation1 [shape = 'u32[144,128]{1,0:T(1,128)}', space=vmem, size = 0x12000, scoped, tag = 'internal scratch']
  %s0 = inlined_call_operand.vmem [shape: f32[16,784], index: 0, kind: input, shape index: {}]
  %s1 = inlined_call_operand.hbm [shape: bf16[784,256], index: 1, kind: input, shape index: {}]
  %s2 = inlined_call_operand.vmem [shape: f32[1,256], index: 2, kind: input, shape index: {}]
  %s3 = inlined_call_operand.vmem [shape: bf16[256,64], index: 3, kind: input, shape index: {}]
  %s4 = inlined_call_operand.vmem [shape: f32[1,64], index: 4, kind: input, shape index: {}]
  %s5 = inlined_call_operand.vmem [shape: f32[16,64], index: 5, kind: output, shape index: {}]
  %s6 = sld [smem:[#allocation0]]
  $region34: #{mlp_forward.1} parent=0
    _
  %s8 = ssub.s32 1, %s6
  %s9 = scalar_select 0, %s8, %s6
  $region1: #{mlp_forward.1} parent=0
    #allocation2 [shape = 'u8[401408]{0}', space=vmem, size = 0x62000, scoped, tag = 'input window, operand 1, single buffered']
    #allocation3 [shape = 's32[1]{0}', space=sflag, size = 0x4, scoped, tag = 'scoped memory for mlp_forward.1']
    %10 = vsyncpa [#allocation3], 0
    // Predicated region
    $region2: #{mlp_forward.1} parent=1 // pred_check
      _
    $region3: #{mlp_forward.1} parent=1 // pred_check_branch
      %12 = sbr.rel (0) target = $region5
    $region4: #{mlp_forward.1} parent=1 // pred_region
      _
    $region5: #{mlp_forward.1} parent=1 // pred_fallthru
      _
    // Predicated region
    $region6: #{mlp_forward.1} parent=1 // pred_check
      _
    $region7: #{mlp_forward.1} parent=1 // pred_check_branch
      %14 = sbr.rel (0) target = $region9
    $region8: #{mlp_forward.1} parent=1 // pred_region
      %s16 = ssub.s32 12544, 12544
      %17 = vsyncadd [#allocation3], %s16
      %s18 = sshll.u32 [#allocation2], 4
      %s19 = int_to_ptr.vmem [resolvable:$true] %s18
      %24 = dma.hbm_to_vmem [thread:$0]  %s1, 12544, %s19, [#allocation3], 128, 128, 8
    $region9: #{mlp_forward.1} parent=1 // pred_fallthru
      _
    // Predicated region
    $region10: #{mlp_forward.1} parent=1 // pred_check
      _
    $region11: #{mlp_forward.1} parent=1 // pred_check_branch
      %26 = sbr.rel (0) target = $region13
    $region12: #{mlp_forward.1} parent=1 // pred_region
      _
    $region13: #{mlp_forward.1} parent=1 // pred_fallthru
      _
    // Predicated region
    $region14: #{mlp_forward.1} parent=1 // pred_check
      _
    $region15: #{mlp_forward.1} parent=1 // pred_check_branch
      %28 = sbr.rel (0) target = $region17
    $region16: #{mlp_forward.1} parent=1 // pred_region
      _
    $region17: #{mlp_forward.1} parent=1 // pred_fallthru
      _
    // Predicated region
    $region18: #{mlp_forward.1} parent=1 // pred_check
      _
    $region19: #{mlp_forward.1} parent=1 // pred_check_branch
      %30 = sbr.rel (0) target = $region21
    $region20: #{mlp_forward.1} parent=1 // pred_region
      _
    $region21: #{mlp_forward.1} parent=1 // pred_fallthru
      _
    // Predicated region
    $region22: #{mlp_forward.1} parent=1 // pred_check
      _
    $region23: #{mlp_forward.1} parent=1 // pred_check_branch
      %32 = sbr.rel (0) target = $region25
    $region24: #{mlp_forward.1} parent=1 // pred_region
      %33 = dma.done [#allocation3], 12544
    $region25: #{mlp_forward.1} parent=1 // pred_fallthru
      _
    %v35 = vld [vmem:[%s0] sm:$0xff]
    %v36 = vld [vmem:[%s0 + $0x8] sm:$0xff]
    %v37 = vld [vmem:[%s0 + $0x10] sm:$0xff]
    %v38 = vld [vmem:[%s0 + $0x18] sm:$0xff]
    %v39 = vld [vmem:[%s0 + $0x20] sm:$0xff]
    %v40 = vld [vmem:[%s0 + $0x28] sm:$0xff]
    %v41 = vld [vmem:[%s0 + $0x30] sm:$0xff]
    %v42 = vld [vmem:[%s0 + $0x38] sm:$0xff]
    %v43 = vld [vmem:[%s0 + $0x40] sm:$0xff]
    %v44 = vld [vmem:[%s0 + $0x48] sm:$0xff]
    %v45 = vld [vmem:[%s0 + $0x50] sm:$0xff]
    %v46 = vld [vmem:[%s0 + $0x58] sm:$0xff]
    %v47 = vld [vmem:[%s0 + $0x60] sm:$0xff]
    %v48 = vld [vmem:[%s0 + $0x68] sm:$0xff]
    %v49 = vpack.c.bf16 %v42, %v35
    %v50 = vpack.c.bf16 %v43, %v36
    %v51 = vpack.c.bf16 %v44, %v37
    %v52 = vpack.c.bf16 %v45, %v38
    %v53 = vpack.c.bf16 %v46, %v39
    %v54 = vpack.c.bf16 %v47, %v40
    %v55 = vpack.c.bf16 %v48, %v41
    %v56 = vld [vmem:[#allocation2] sm:$0xff]
    %v57 = vld [vmem:[#allocation2 + $0x8] sm:$0xff]
    %v58 = vld [vmem:[#allocation2 + $0x10] sm:$0xff]
    %v59 = vld [vmem:[#allocation2 + $0x18] sm:$0xff]
    %v60 = vld [vmem:[#allocation2 + $0x20] sm:$0xff]
    %v61 = vld [vmem:[#allocation2 + $0x28] sm:$0xff]
    %v62 = vld [vmem:[#allocation2 + $0x30] sm:$0xff]
    %v63 = vld [vmem:[#allocation2 + $0x38] sm:$0xff]
    %v64 = vld [vmem:[#allocation2 + $0x40] sm:$0xff]
    %v65 = vld [vmem:[#allocation2 + $0x48] sm:$0xff]
    %v66 = vld [vmem:[#allocation2 + $0x50] sm:$0xff]
    %v67 = vld [vmem:[#allocation2 + $0x58] sm:$0xff]
    %v68 = vld [vmem:[#allocation2 + $0x60] sm:$0xff]
    %v69 = vld [vmem:[#allocation2 + $0x68] sm:$0xff]
    %v70 = vld [vmem:[#allocation2 + $0x70] sm:$0xff]
    %v71 = vld [vmem:[#allocation2 + $0x78] sm:$0xff]
    %v72 = vld [vmem:[#allocation2 + $0x80] sm:$0xff]
    %v73 = vld [vmem:[#allocation2 + $0x88] sm:$0xff]
    %v74 = vld [vmem:[#allocation2 + $0x90] sm:$0xff]
    %v75 = vld [vmem:[#allocation2 + $0x98] sm:$0xff]
    %v76 = vld [vmem:[#allocation2 + $0xa0] sm:$0xff]
    %v77 = vld [vmem:[#allocation2 + $0xa8] sm:$0xff]
    %v78 = vld [vmem:[#allocation2 + $0xb0] sm:$0xff]
    %v79 = vld [vmem:[#allocation2 + $0xb8] sm:$0xff]
    %v80 = vld [vmem:[#allocation2 + $0xc0] sm:$0xff]
    %v81 = vld [vmem:[#allocation2 + $0xc8] sm:$0xff]
    %v82 = vld [vmem:[#allocation2 + $0xd0] sm:$0xff]
    %v83 = vld [vmem:[#allocation2 + $0xd8] sm:$0xff]
    %v84 = vld [vmem:[#allocation2 + $0xe0] sm:$0xff]
    %v85 = vld [vmem:[#allocation2 + $0xe8] sm:$0xff]
    %v86 = vld [vmem:[#allocation2 + $0xf0] sm:$0xff]
    %v87 = vld [vmem:[#allocation2 + $0xf8] sm:$0xff]
    %v88 = vld [vmem:[#allocation2 + $0x100] sm:$0xff]
    %v89 = vld [vmem:[#allocation2 + $0x108] sm:$0xff]
    %v90 = vld [vmem:[#allocation2 + $0x110] sm:$0xff]
    %v91 = vld [vmem:[#allocation2 + $0x118] sm:$0xff]
    %v92 = vld [vmem:[#allocation2 + $0x120] sm:$0xff]
    %v93 = vld [vmem:[#allocation2 + $0x128] sm:$0xff]
    %v94 = vld [vmem:[#allocation2 + $0x130] sm:$0xff]
    %v95 = vld [vmem:[#allocation2 + $0x138] sm:$0xff]
    %v96 = vld [vmem:[#allocation2 + $0x140] sm:$0xff]
    %v97 = vld [vmem:[#allocation2 + $0x148] sm:$0xff]
    %v98 = vld [vmem:[#allocation2 + $0x150] sm:$0xff]
    %v99 = vld [vmem:[#allocation2 + $0x158] sm:$0xff]
    %v100 = vld [vmem:[#allocation2 + $0x160] sm:$0xff]
    %v101 = vld [vmem:[#allocation2 + $0x168] sm:$0xff]
    %v102 = vld [vmem:[#allocation2 + $0x170] sm:$0xff]
    %v103 = vld [vmem:[#allocation2 + $0x178] sm:$0xff]
    %v104 = vld [vmem:[#allocation2 + $0x180] sm:$0xff]
    %v105 = vld [vmem:[#allocation2 + $0x188] sm:$0xff]
    %v106 = vld [vmem:[#allocation2 + $0x190] sm:$0xff]
    %v107 = vld [vmem:[#allocation2 + $0x198] sm:$0xff]
    %v108 = vld [vmem:[#allocation2 + $0x1a0] sm:$0xff]
    %v109 = vld [vmem:[#allocation2 + $0x1a8] sm:$0xff]
    %v110 = vld [vmem:[#allocation2 + $0x1b0] sm:$0xff]
    %v111 = vld [vmem:[#allocation2 + $0x1b8] sm:$0xff]
    %v112 = vld [vmem:[#allocation2 + $0x1c0] sm:$0xff]
    %v113 = vld [vmem:[#allocation2 + $0x1c8] sm:$0xff]
    %v114 = vld [vmem:[#allocation2 + $0x1d0] sm:$0xff]
    %v115 = vld [vmem:[#allocation2 + $0x1d8] sm:$0xff]
    %v116 = vld [vmem:[#allocation2 + $0x1e0] sm:$0xff]
    %v117 = vld [vmem:[#allocation2 + $0x1e8] sm:$0xff]
    %v118 = vld [vmem:[#allocation2 + $0x1f0] sm:$0xff]
    %v119 = vld [vmem:[#allocation2 + $0x1f8] sm:$0xff]
    %v120 = vld [vmem:[#allocation2 + $0x200] sm:$0xff]
    %v121 = vld [vmem:[#allocation2 + $0x208] sm:$0xff]
    %v122 = vld [vmem:[#allocation2 + $0x210] sm:$0xff]
    %v123 = vld [vmem:[#allocation2 + $0x218] sm:$0xff]
    %v124 = vld [vmem:[#allocation2 + $0x220] sm:$0xff]
    %v125 = vld [vmem:[#allocation2 + $0x228] sm:$0xff]
    %v126 = vld [vmem:[#allocation2 + $0x230] sm:$0xff]
    %v127 = vld [vmem:[#allocation2 + $0x238] sm:$0xff]
    %v128 = vld [vmem:[#allocation2 + $0x240] sm:$0xff]
    %v129 = vld [vmem:[#allocation2 + $0x248] sm:$0xff]
    %v130 = vld [vmem:[#allocation2 + $0x250] sm:$0xff]
    %v131 = vld [vmem:[#allocation2 + $0x258] sm:$0xff]
    %v132 = vld [vmem:[#allocation2 + $0x260] sm:$0xff]
    %v133 = vld [vmem:[#allocation2 + $0x268] sm:$0xff]
    %v134 = vld [vmem:[#allocation2 + $0x270] sm:$0xff]
    %v135 = vld [vmem:[#allocation2 + $0x278] sm:$0xff]
    %v136 = vld [vmem:[#allocation2 + $0x280] sm:$0xff]
    %v137 = vld [vmem:[#allocation2 + $0x288] sm:$0xff]
    %v138 = vld [vmem:[#allocation2 + $0x290] sm:$0xff]
    %v139 = vld [vmem:[#allocation2 + $0x298] sm:$0xff]
    %v140 = vld [vmem:[#allocation2 + $0x2a0] sm:$0xff]
    %v141 = vld [vmem:[#allocation2 + $0x2a8] sm:$0xff]
    %v142 = vld [vmem:[#allocation2 + $0x2b0] sm:$0xff]
    %v143 = vld [vmem:[#allocation2 + $0x2b8] sm:$0xff]
    %v144 = vld [vmem:[#allocation2 + $0x2c0] sm:$0xff]
    %v145 = vld [vmem:[#allocation2 + $0x2c8] sm:$0xff]
    %v146 = vld [vmem:[#allocation2 + $0x2d0] sm:$0xff]
    %v147 = vld [vmem:[#allocation2 + $0x2d8] sm:$0xff]
    %v148 = vld [vmem:[#allocation2 + $0x2e0] sm:$0xff]
    %v149 = vld [vmem:[#allocation2 + $0x2e8] sm:$0xff]
    %v150 = vld [vmem:[#allocation2 + $0x2f0] sm:$0xff]
    %v151 = vld [vmem:[#allocation2 + $0x2f8] sm:$0xff]
    %v152 = vld [vmem:[#allocation2 + $0x300] sm:$0xff]
    %v153 = vld [vmem:[#allocation2 + $0x308] sm:$0xff]
    %v154 = vld [vmem:[%s2] sm:$0x3]
    %v156 = vlaneseq
    %v157 = vshrl.u32 %v156, 7
    %v158 = vsub.s32 0, %v157
    %v159 = vrot.slane %v154, %v158
    %v160 = vlaneseq
    %v161 = vshrl.u32 %v160, 7
    %v162 = vsub.s32 1, %v161
    %v163 = vrot.slane %v154, %v162
    %v264 = vunpack.c.l.b16 %v56
    %v265 = vunpack.c.h.b16 %v56
    %v266 = vunpack.c.l.b16 %v57
    %v267 = vunpack.c.h.b16 %v57
    %v268 = vunpack.c.l.b16 %v58
    %v269 = vunpack.c.h.b16 %v58
    %v270 = vunpack.c.l.b16 %v59
    %v271 = vunpack.c.h.b16 %v59
    %v272 = vunpack.c.l.b16 %v60
    %v273 = vunpack.c.h.b16 %v60
    %v274 = vunpack.c.l.b16 %v61
    %v275 = vunpack.c.h.b16 %v61
    %v276 = vunpack.c.l.b16 %v62
    %v277 = vunpack.c.h.b16 %v62
    %v278 = vunpack.c.l.b16 %v63
    %v279 = vunpack.c.h.b16 %v63
    %v280 = vunpack.c.l.b16 %v64
    %v281 = vunpack.c.h.b16 %v64
    %v282 = vunpack.c.l.b16 %v65
    %v283 = vunpack.c.h.b16 %v65
    %v284 = vunpack.c.l.b16 %v66
    %v285 = vunpack.c.h.b16 %v66
    %v286 = vunpack.c.l.b16 %v67
    %v287 = vunpack.c.h.b16 %v67
    %v288 = vunpack.c.l.b16 %v68
    %v289 = vunpack.c.h.b16 %v68
    %v290 = vunpack.c.l.b16 %v69
    %v291 = vunpack.c.h.b16 %v69
    %v292 = vunpack.c.l.b16 %v70
    %v293 = vunpack.c.h.b16 %v70
    %v294 = vunpack.c.l.b16 %v71
    %v295 = vunpack.c.h.b16 %v71
    %v296 = vunpack.c.l.b16 %v72
    %v297 = vunpack.c.h.b16 %v72
    %v298 = vunpack.c.l.b16 %v73
    %v299 = vunpack.c.h.b16 %v73
    %v300 = vunpack.c.l.b16 %v74
    %v301 = vunpack.c.h.b16 %v74
    %v302 = vunpack.c.l.b16 %v75
    %v303 = vunpack.c.h.b16 %v75
    %v304 = vunpack.c.l.b16 %v76
    %v305 = vunpack.c.h.b16 %v76
    %v306 = vunpack.c.l.b16 %v77
    %v307 = vunpack.c.h.b16 %v77
    %v308 = vunpack.c.l.b16 %v78
    %v309 = vunpack.c.h.b16 %v78
    %v310 = vunpack.c.l.b16 %v79
    %v311 = vunpack.c.h.b16 %v79
    %v312 = vunpack.c.l.b16 %v80
    %v313 = vunpack.c.h.b16 %v80
    %v314 = vunpack.c.l.b16 %v81
    %v315 = vunpack.c.h.b16 %v81
    %v316 = vunpack.c.l.b16 %v82
    %v317 = vunpack.c.h.b16 %v82
    %v318 = vunpack.c.l.b16 %v83
    %v319 = vunpack.c.h.b16 %v83
    %v320 = vunpack.c.l.b16 %v84
    %v321 = vunpack.c.h.b16 %v84
    %v322 = vunpack.c.l.b16 %v85
    %v323 = vunpack.c.h.b16 %v85
    %v324 = vunpack.c.l.b16 %v86
    %v325 = vunpack.c.h.b16 %v86
    %v326 = vunpack.c.l.b16 %v87
    %v327 = vunpack.c.h.b16 %v87
    %v328 = vunpack.c.l.b16 %v88
    %v329 = vunpack.c.h.b16 %v88
    %v330 = vunpack.c.l.b16 %v89
    %v331 = vunpack.c.h.b16 %v89
    %v332 = vunpack.c.l.b16 %v90
    %v333 = vunpack.c.h.b16 %v90
    %v334 = vunpack.c.l.b16 %v91
    %v335 = vunpack.c.h.b16 %v91
    %v336 = vunpack.c.l.b16 %v92
    %v337 = vunpack.c.h.b16 %v92
    %v338 = vunpack.c.l.b16 %v93
    %v339 = vunpack.c.h.b16 %v93
    %v340 = vunpack.c.l.b16 %v94
    %v341 = vunpack.c.h.b16 %v94
    %v342 = vunpack.c.l.b16 %v95
    %v343 = vunpack.c.h.b16 %v95
    %v344 = vunpack.c.l.b16 %v96
    %v345 = vunpack.c.h.b16 %v96
    %v346 = vunpack.c.l.b16 %v97
    %v347 = vunpack.c.h.b16 %v97
    %v348 = vunpack.c.l.b16 %v98
    %v349 = vunpack.c.h.b16 %v98
    %v350 = vunpack.c.l.b16 %v99
    %v351 = vunpack.c.h.b16 %v99
    %v352 = vunpack.c.l.b16 %v100
    %v353 = vunpack.c.h.b16 %v100
    %v354 = vunpack.c.l.b16 %v101
    %v355 = vunpack.c.h.b16 %v101
    %v356 = vunpack.c.l.b16 %v102
    %v357 = vunpack.c.h.b16 %v102
    %v358 = vunpack.c.l.b16 %v103
    %v359 = vunpack.c.h.b16 %v103
    %v360 = vunpack.c.l.b16 %v104
    %v361 = vunpack.c.h.b16 %v104
    %v362 = vunpack.c.l.b16 %v105
    %v363 = vunpack.c.h.b16 %v105
    %v364 = vunpack.c.l.b16 %v106
    %v365 = vunpack.c.h.b16 %v106
    %v366 = vunpack.c.l.b16 %v107
    %v367 = vunpack.c.h.b16 %v107
    %v368 = vunpack.c.l.b16 %v108
    %v369 = vunpack.c.h.b16 %v108
    %v370 = vunpack.c.l.b16 %v109
    %v371 = vunpack.c.h.b16 %v109
    %v372 = vunpack.c.l.b16 %v110
    %v373 = vunpack.c.h.b16 %v110
    %v374 = vunpack.c.l.b16 %v111
    %v375 = vunpack.c.h.b16 %v111
    %v376 = vunpack.c.l.b16 %v112
    %v377 = vunpack.c.h.b16 %v112
    %v378 = vunpack.c.l.b16 %v113
    %v379 = vunpack.c.h.b16 %v113
    %v380 = vunpack.c.l.b16 %v114
    %v381 = vunpack.c.h.b16 %v114
    %v382 = vunpack.c.l.b16 %v115
    %v383 = vunpack.c.h.b16 %v115
    %v384 = vunpack.c.l.b16 %v116
    %v385 = vunpack.c.h.b16 %v116
    %v386 = vunpack.c.l.b16 %v117
    %v387 = vunpack.c.h.b16 %v117
    %v388 = vunpack.c.l.b16 %v118
    %v389 = vunpack.c.h.b16 %v118
    %v390 = vunpack.c.l.b16 %v119
    %v391 = vunpack.c.h.b16 %v119
    %v392 = vunpack.c.l.b16 %v120
    %v393 = vunpack.c.h.b16 %v120
    %v394 = vunpack.c.l.b16 %v121
    %v395 = vunpack.c.h.b16 %v121
    %v396 = vunpack.c.l.b16 %v122
    %v397 = vunpack.c.h.b16 %v122
    %v398 = vunpack.c.l.b16 %v123
    %v399 = vunpack.c.h.b16 %v123
    %v400 = vunpack.c.l.b16 %v124
    %v401 = vunpack.c.h.b16 %v124
    %v402 = vunpack.c.l.b16 %v125
    %v403 = vunpack.c.h.b16 %v125
    %v404 = vunpack.c.l.b16 %v126
    %v405 = vunpack.c.h.b16 %v126
    %v406 = vunpack.c.l.b16 %v127
    %v407 = vunpack.c.h.b16 %v127
    %v408 = vunpack.c.l.b16 %v128
    %v409 = vunpack.c.h.b16 %v128
    %v410 = vunpack.c.l.b16 %v129
    %v411 = vunpack.c.h.b16 %v129
    %v412 = vunpack.c.l.b16 %v130
    %v413 = vunpack.c.h.b16 %v130
    %v414 = vunpack.c.l.b16 %v131
    %v415 = vunpack.c.h.b16 %v131
    %v416 = vunpack.c.l.b16 %v132
    %v417 = vunpack.c.h.b16 %v132
    %v418 = vunpack.c.l.b16 %v133
    %v419 = vunpack.c.h.b16 %v133
    %v420 = vunpack.c.l.b16 %v134
    %v421 = vunpack.c.h.b16 %v134
    %v422 = vunpack.c.l.b16 %v135
    %v423 = vunpack.c.h.b16 %v135
    %v424 = vunpack.c.l.b16 %v136
    %v425 = vunpack.c.h.b16 %v136
    %v426 = vunpack.c.l.b16 %v137
    %v427 = vunpack.c.h.b16 %v137
    %v428 = vunpack.c.l.b16 %v138
    %v429 = vunpack.c.h.b16 %v138
    %v430 = vunpack.c.l.b16 %v139
    %v431 = vunpack.c.h.b16 %v139
    %v432 = vunpack.c.l.b16 %v140
    %v433 = vunpack.c.h.b16 %v140
    %v434 = vunpack.c.l.b16 %v141
    %v435 = vunpack.c.h.b16 %v141
    %v436 = vunpack.c.l.b16 %v142
    %v437 = vunpack.c.h.b16 %v142
    %v438 = vunpack.c.l.b16 %v143
    %v439 = vunpack.c.h.b16 %v143
    %v440 = vunpack.c.l.b16 %v144
    %v441 = vunpack.c.h.b16 %v144
    %v442 = vunpack.c.l.b16 %v145
    %v443 = vunpack.c.h.b16 %v145
    %v444 = vunpack.c.l.b16 %v146
    %v445 = vunpack.c.h.b16 %v146
    %v446 = vunpack.c.l.b16 %v147
    %v447 = vunpack.c.h.b16 %v147
    %v448 = vunpack.c.l.b16 %v148
    %v449 = vunpack.c.h.b16 %v148
    %v450 = vunpack.c.l.b16 %v149
    %v451 = vunpack.c.h.b16 %v149
    %v452 = vunpack.c.l.b16 %v150
    %v453 = vunpack.c.h.b16 %v150
    %v454 = vunpack.c.l.b16 %v151
    %v455 = vunpack.c.h.b16 %v151
    %v456 = vunpack.c.l.b16 %v152
    %v457 = vunpack.c.h.b16 %v152
    %v458 = vunpack.c.l.b16 %v153
    %v459 = vunpack.c.h.b16 %v153
    %v460 = vpack.c.b16 %v266, %v264
    %v461 = vpack.c.b16 %v267, %v265
    %v462 = vpack.c.b16 %v270, %v268
    %v463 = vpack.c.b16 %v271, %v269
    %v464 = vpack.c.b16 %v274, %v272
    %v465 = vpack.c.b16 %v275, %v273
    %v466 = vpack.c.b16 %v278, %v276
    %v467 = vpack.c.b16 %v279, %v277
    %v468 = vpack.c.b16 %v282, %v280
    %v469 = vpack.c.b16 %v283, %v281
    %v470 = vpack.c.b16 %v286, %v284
    %v471 = vpack.c.b16 %v287, %v285
    %v472 = vpack.c.b16 %v290, %v288
    %v473 = vpack.c.b16 %v291, %v289
    %v474 = vpack.c.b16 %v294, %v292
    %v475 = vpack.c.b16 %v295, %v293
    %v476 = vpack.c.b16 %v298, %v296
    %v477 = vpack.c.b16 %v299, %v297
    %v478 = vpack.c.b16 %v302, %v300
    %v479 = vpack.c.b16 %v303, %v301
    %v480 = vpack.c.b16 %v306, %v304
    %v481 = vpack.c.b16 %v307, %v305
    %v482 = vpack.c.b16 %v310, %v308
    %v483 = vpack.c.b16 %v311, %v309
    %v484 = vpack.c.b16 %v314, %v312
    %v485 = vpack.c.b16 %v315, %v313
    %v486 = vpack.c.b16 %v318, %v316
    %v487 = vpack.c.b16 %v319, %v317
    %v488 = vpack.c.b16 %v322, %v320
    %v489 = vpack.c.b16 %v323, %v321
    %v490 = vpack.c.b16 %v326, %v324
    %v491 = vpack.c.b16 %v327, %v325
    %v492 = vpack.c.b16 %v330, %v328
    %v493 = vpack.c.b16 %v331, %v329
    %v494 = vpack.c.b16 %v334, %v332
    %v495 = vpack.c.b16 %v335, %v333
    %v496 = vpack.c.b16 %v338, %v336
    %v497 = vpack.c.b16 %v339, %v337
    %v498 = vpack.c.b16 %v342, %v340
    %v499 = vpack.c.b16 %v343, %v341
    %v500 = vpack.c.b16 %v346, %v344
    %v501 = vpack.c.b16 %v347, %v345
    %v502 = vpack.c.b16 %v350, %v348
    %v503 = vpack.c.b16 %v351, %v349
    %v504 = vpack.c.b16 %v354, %v352
    %v505 = vpack.c.b16 %v355, %v353
    %v506 = vpack.c.b16 %v358, %v356
    %v507 = vpack.c.b16 %v359, %v357
    %v508 = vpack.c.b16 %v362, %v360
    %v509 = vpack.c.b16 %v363, %v361
    %v510 = vpack.c.b16 %v366, %v364
    %v511 = vpack.c.b16 %v367, %v365
    %v512 = vpack.c.b16 %v370, %v368
    %v513 = vpack.c.b16 %v371, %v369
    %v514 = vpack.c.b16 %v374, %v372
    %v515 = vpack.c.b16 %v375, %v373
    %v516 = vpack.c.b16 %v378, %v376
    %v517 = vpack.c.b16 %v379, %v377
    %v518 = vpack.c.b16 %v382, %v380
    %v519 = vpack.c.b16 %v383, %v381
    %v520 = vpack.c.b16 %v386, %v384
    %v521 = vpack.c.b16 %v387, %v385
    %v522 = vpack.c.b16 %v390, %v388
    %v523 = vpack.c.b16 %v391, %v389
    %v524 = vpack.c.b16 %v394, %v392
    %v525 = vpack.c.b16 %v395, %v393
    %v526 = vpack.c.b16 %v398, %v396
    %v527 = vpack.c.b16 %v399, %v397
    %v528 = vpack.c.b16 %v402, %v400
    %v529 = vpack.c.b16 %v403, %v401
    %v530 = vpack.c.b16 %v406, %v404
    %v531 = vpack.c.b16 %v407, %v405
    %v532 = vpack.c.b16 %v410, %v408
    %v533 = vpack.c.b16 %v411, %v409
    %v534 = vpack.c.b16 %v414, %v412
    %v535 = vpack.c.b16 %v415, %v413
    %v536 = vpack.c.b16 %v418, %v416
    %v537 = vpack.c.b16 %v419, %v417
    %v538 = vpack.c.b16 %v422, %v420
    %v539 = vpack.c.b16 %v423, %v421
    %v540 = vpack.c.b16 %v426, %v424
    %v541 = vpack.c.b16 %v427, %v425
    %v542 = vpack.c.b16 %v430, %v428
    %v543 = vpack.c.b16 %v431, %v429
    %v544 = vpack.c.b16 %v434, %v432
    %v545 = vpack.c.b16 %v435, %v433
    %v546 = vpack.c.b16 %v438, %v436
    %v547 = vpack.c.b16 %v439, %v437
    %v548 = vpack.c.b16 %v442, %v440
    %v549 = vpack.c.b16 %v443, %v441
    %v550 = vpack.c.b16 %v446, %v444
    %v551 = vpack.c.b16 %v447, %v445
    %v552 = vpack.c.b16 %v450, %v448
    %v553 = vpack.c.b16 %v451, %v449
    %v554 = vpack.c.b16 %v454, %v452
    %v555 = vpack.c.b16 %v455, %v453
    %v556 = vpack.c.b16 %v458, %v456
    %v557 = vpack.c.b16 %v459, %v457
    %vm656 = vcmask 130048
    %v658 = vsel %vm656, %v55, 0
    %660 = vmatprep.subr.bf16.mxu0 %v461
    %661 = vmatpush1.bf16.msra.mxu0 %v460
    %662 = vmatprep.subr.bf16.mxu0 %v463
    %663 = vmatpush1.bf16.msra.mxu0 %v462
    %664 = vmatprep.subr.bf16.mxu0 %v465
    %665 = vmatpush1.bf16.msra.mxu0 %v464
    %666 = vmatprep.subr.bf16.mxu0 %v467
    %667 = vmatpush1.bf16.msra.mxu0 %v466
    %668 = vmatprep.subr.bf16.mxu0 %v469
    %669 = vmatpush1.bf16.msra.mxu0 %v468
    %670 = vmatprep.subr.bf16.mxu0 %v471
    %671 = vmatpush1.bf16.msra.mxu0 %v470
    %672 = vmatprep.subr.bf16.mxu0 %v473
    %673 = vmatpush1.bf16.msra.mxu0 %v472
    %674 = vmatprep.subr.bf16.mxu0 %v475
    %675 = vmatpush1.bf16.msra.mxu0 %v474
    %676 = vmatprep.subr.bf16.mxu0 %v477
    %677 = vmatpush1.bf16.msra.mxu0 %v476
    %678 = vmatprep.subr.bf16.mxu0 %v479
    %679 = vmatpush1.bf16.msra.mxu0 %v478
    %680 = vmatprep.subr.bf16.mxu0 %v481
    %681 = vmatpush1.bf16.msra.mxu0 %v480
    %682 = vmatprep.subr.bf16.mxu0 %v483
    %683 = vmatpush1.bf16.msra.mxu0 %v482
    %684 = vmatprep.subr.bf16.mxu0 %v485
    %685 = vmatpush1.bf16.msra.mxu0 %v484
    %686 = vmatprep.subr.bf16.mxu0 %v487
    %687 = vmatpush1.bf16.msra.mxu0 %v486
    %688 = vmatprep.subr.bf16.mxu0 %v489
    %689 = vmatpush1.bf16.msra.mxu0 %v488
    %690 = vmatprep.subr.bf16.mxu0 %v491
    %691 = vmatpush1.bf16.msra.mxu0 %v490
    %692 = vmatprep.mubr.bf16.mxu0 %v50
    %693 = vmatmul.mubr.bf16.gmra.mrb[0].mxu0 %v49
    %v694 = vpop.f32.mrb[0].mxu0
    %v695 = vadd.f32 %v159, %v694
    %v696 = vpop.f32.mrb[0].mxu0
    %v697 = vadd.f32 %v163, %v696
    %v698 = vpop.f32.mrb[0].mxu0
    %v699 = vadd.f32 %v159, %v698
    %v700 = vpop.f32.mrb[0].mxu0
    %v701 = vadd.f32 %v163, %v700
    %702 = vdwg.mxu0
    %703 = vmatprep.subr.bf16.mxu0 %v493
    %704 = vmatpush1.bf16.msra.mxu0 %v492
    %705 = vmatprep.subr.bf16.mxu0 %v495
    %706 = vmatpush1.bf16.msra.mxu0 %v494
    %707 = vmatprep.subr.bf16.mxu0 %v497
    %708 = vmatpush1.bf16.msra.mxu0 %v496
    %709 = vmatprep.subr.bf16.mxu0 %v499
    %710 = vmatpush1.bf16.msra.mxu0 %v498
    %711 = vmatprep.subr.bf16.mxu0 %v501
    %712 = vmatpush1.bf16.msra.mxu0 %v500
    %713 = vmatprep.subr.bf16.mxu0 %v503
    %714 = vmatpush1.bf16.msra.mxu0 %v502
    %715 = vmatprep.subr.bf16.mxu0 %v505
    %716 = vmatpush1.bf16.msra.mxu0 %v504
    %717 = vmatprep.subr.bf16.mxu0 %v507
    %718 = vmatpush1.bf16.msra.mxu0 %v506
    %719 = vmatprep.subr.bf16.mxu0 %v509
    %720 = vmatpush1.bf16.msra.mxu0 %v508
    %721 = vmatprep.subr.bf16.mxu0 %v511
    %722 = vmatpush1.bf16.msra.mxu0 %v510
    %723 = vmatprep.subr.bf16.mxu0 %v513
    %724 = vmatpush1.bf16.msra.mxu0 %v512
    %725 = vmatprep.subr.bf16.mxu0 %v515
    %726 = vmatpush1.bf16.msra.mxu0 %v514
    %727 = vmatprep.subr.bf16.mxu0 %v517
    %728 = vmatpush1.bf16.msra.mxu0 %v516
    %729 = vmatprep.subr.bf16.mxu0 %v519
    %730 = vmatpush1.bf16.msra.mxu0 %v518
    %731 = vmatprep.subr.bf16.mxu0 %v521
    %732 = vmatpush1.bf16.msra.mxu0 %v520
    %733 = vmatprep.subr.bf16.mxu0 %v523
    %734 = vmatpush1.bf16.msra.mxu0 %v522
    %735 = vmatprep.mubr.bf16.mxu0 %v52
    %736 = vmatmul.mubr.bf16.gmra.mrb[0].mxu0 %v51
    %v737 = vpop.f32.mrb[0].mxu0
    %v738 = vadd.f32 %v695, %v737
    %v739 = vpop.f32.mrb[0].mxu0
    %v740 = vadd.f32 %v697, %v739
    %v741 = vpop.f32.mrb[0].mxu0
    %v742 = vadd.f32 %v699, %v741
    %v743 = vpop.f32.mrb[0].mxu0
    %v744 = vadd.f32 %v701, %v743
    %745 = vdwg.mxu0
    %746 = vmatprep.subr.bf16.mxu0 %v525
    %747 = vmatpush1.bf16.msra.mxu0 %v524
    %748 = vmatprep.subr.bf16.mxu0 %v527
    %749 = vmatpush1.bf16.msra.mxu0 %v526
    %750 = vmatprep.subr.bf16.mxu0 %v529
    %751 = vmatpush1.bf16.msra.mxu0 %v528
    %752 = vmatprep.subr.bf16.mxu0 %v531
    %753 = vmatpush1.bf16.msra.mxu0 %v530
    %754 = vmatprep.subr.bf16.mxu0 %v533
    %755 = vmatpush1.bf16.msra.mxu0 %v532
    %756 = vmatprep.subr.bf16.mxu0 %v535
    %757 = vmatpush1.bf16.msra.mxu0 %v534
    %758 = vmatprep.subr.bf16.mxu0 %v537
    %759 = vmatpush1.bf16.msra.mxu0 %v536
    %760 = vmatprep.subr.bf16.mxu0 %v539
    %761 = vmatpush1.bf16.msra.mxu0 %v538
    %762 = vmatprep.subr.bf16.mxu0 %v541
    %763 = vmatpush1.bf16.msra.mxu0 %v540
    %764 = vmatprep.subr.bf16.mxu0 %v543
    %765 = vmatpush1.bf16.msra.mxu0 %v542
    %766 = vmatprep.subr.bf16.mxu0 %v545
    %767 = vmatpush1.bf16.msra.mxu0 %v544
    %768 = vmatprep.subr.bf16.mxu0 %v547
    %769 = vmatpush1.bf16.msra.mxu0 %v546
    %770 = vmatprep.subr.bf16.mxu0 %v549
    %771 = vmatpush1.bf16.msra.mxu0 %v548
    %772 = vmatprep.subr.bf16.mxu0 %v551
    %773 = vmatpush1.bf16.msra.mxu0 %v550
    %774 = vmatprep.subr.bf16.mxu0 %v553
    %775 = vmatpush1.bf16.msra.mxu0 %v552
    %776 = vmatprep.subr.bf16.mxu0 %v555
    %777 = vmatpush1.bf16.msra.mxu0 %v554
    %778 = vmatprep.mubr.bf16.mxu0 %v54
    %779 = vmatmul.mubr.bf16.gmra.mrb[0].mxu0 %v53
    %v780 = vpop.f32.mrb[0].mxu0
    %v781 = vadd.f32 %v738, %v780
    %v782 = vpop.f32.mrb[0].mxu0
    %v783 = vadd.f32 %v740, %v782
    %v784 = vpop.f32.mrb[0].mxu0
    %v785 = vadd.f32 %v742, %v784
    %v786 = vpop.f32.mrb[0].mxu0
    %v787 = vadd.f32 %v744, %v786
    %788 = vdwg.mxu0
    %789 = vmatprep.subr.bf16.mxu0 %v557
    %790 = vmatpush1.bf16.msra.mxu0 %v556
    %791 = vmatprep.subr.bf16.mxu0 0
    %792 = vmatpush1.bf16.msra.mxu0 0
    %793 = vmatprep.subr.bf16.mxu0 0
    %794 = vmatpush1.bf16.msra.mxu0 0
    %795 = vmatprep.subr.bf16.mxu0 0
    %796 = vmatpush1.bf16.msra.mxu0 0
    %797 = vmatprep.subr.bf16.mxu0 0
    %798 = vmatpush1.bf16.msra.mxu0 0
    %799 = vmatprep.subr.bf16.mxu0 0
    %800 = vmatpush1.bf16.msra.mxu0 0
    %801 = vmatprep.subr.bf16.mxu0 0
    %802 = vmatpush1.bf16.msra.mxu0 0
    %803 = vmatprep.subr.bf16.mxu0 0
    %804 = vmatpush1.bf16.msra.mxu0 0
    %805 = vmatprep.subr.bf16.mxu0 0
    %806 = vmatpush1.bf16.msra.mxu0 0
    %807 = vmatprep.subr.bf16.mxu0 0
    %808 = vmatpush1.bf16.msra.mxu0 0
    %809 = vmatprep.subr.bf16.mxu0 0
    %810 = vmatpush1.bf16.msra.mxu0 0
    %811 = vmatprep.subr.bf16.mxu0 0
    %812 = vmatpush1.bf16.msra.mxu0 0
    %813 = vmatprep.subr.bf16.mxu0 0
    %814 = vmatpush1.bf16.msra.mxu0 0
    %815 = vmatprep.subr.bf16.mxu0 0
    %816 = vmatpush1.bf16.msra.mxu0 0
    %817 = vmatprep.subr.bf16.mxu0 0
    %818 = vmatpush1.bf16.msra.mxu0 0
    %819 = vmatprep.subr.bf16.mxu0 0
    %820 = vmatpush1.bf16.msra.mxu0 0
    %821 = vmatprep.mubr.bf16.mxu0 0
    %822 = vmatmul.mubr.bf16.gmra.mrb[0].mxu0 %v658
    %v823 = vpop.f32.mrb[0].mxu0
    %v824 = vadd.f32 %v781, %v823
    %v825 = vpop.f32.mrb[0].mxu0
    %v826 = vadd.f32 %v783, %v825
    %v827 = vpop.f32.mrb[0].mxu0
    %v828 = vadd.f32 %v785, %v827
    %v829 = vpop.f32.mrb[0].mxu0
    %v830 = vadd.f32 %v787, %v829
    %831 = vdwg.mxu0
    %v832 = vmul.f32 %v824, 0.01
    %v833 = vmul.f32 %v826, 0.01
    %v834 = vmul.f32 %v828, 0.01
    %v835 = vmul.f32 %v830, 0.01
    %v836 = vmax.f32 %v824, %v832
    %v837 = vmax.f32 %v826, %v833
    %v838 = vmax.f32 %v828, %v834
    %v839 = vmax.f32 %v830, %v835
    %v840 = vpack.c.bf16 %v838, %v836
    %v841 = vpack.c.bf16 %v839, %v837
    %v842 = vld [vmem:[%s3] sm:$0xf]
    %v843 = vld [vmem:[%s3 + $0x4] sm:$0xf]
    %v844 = vld [vmem:[%s3 + $0x8] sm:$0xf]
    %v845 = vld [vmem:[%s3 + $0xc] sm:$0xf]
    %v846 = vld [vmem:[%s3 + $0x10] sm:$0xf]
    %v847 = vld [vmem:[%s3 + $0x14] sm:$0xf]
    %v848 = vld [vmem:[%s3 + $0x18] sm:$0xf]
    %v849 = vld [vmem:[%s3 + $0x1c] sm:$0xf]
    %v850 = vld [vmem:[%s3 + $0x20] sm:$0xf]
    %v851 = vld [vmem:[%s3 + $0x24] sm:$0xf]
    %v852 = vld [vmem:[%s3 + $0x28] sm:$0xf]
    %v853 = vld [vmem:[%s3 + $0x2c] sm:$0xf]
    %v854 = vld [vmem:[%s3 + $0x30] sm:$0xf]
    %v855 = vld [vmem:[%s3 + $0x34] sm:$0xf]
    %v856 = vld [vmem:[%s3 + $0x38] sm:$0xf]
    %v857 = vld [vmem:[%s3 + $0x3c] sm:$0xf]
    %v858 = vld [vmem:[%s3 + $0x40] sm:$0xf]
    %v859 = vld [vmem:[%s3 + $0x44] sm:$0xf]
    %v860 = vld [vmem:[%s3 + $0x48] sm:$0xf]
    %v861 = vld [vmem:[%s3 + $0x4c] sm:$0xf]
    %v862 = vld [vmem:[%s3 + $0x50] sm:$0xf]
    %v863 = vld [vmem:[%s3 + $0x54] sm:$0xf]
    %v864 = vld [vmem:[%s3 + $0x58] sm:$0xf]
    %v865 = vld [vmem:[%s3 + $0x5c] sm:$0xf]
    %v866 = vld [vmem:[%s3 + $0x60] sm:$0xf]
    %v867 = vld [vmem:[%s3 + $0x64] sm:$0xf]
    %v868 = vld [vmem:[%s3 + $0x68] sm:$0xf]
    %v869 = vld [vmem:[%s3 + $0x6c] sm:$0xf]
    %v870 = vld [vmem:[%s3 + $0x70] sm:$0xf]
    %v871 = vld [vmem:[%s3 + $0x74] sm:$0xf]
    %v872 = vld [vmem:[%s3 + $0x78] sm:$0xf]
    %v873 = vld [vmem:[%s3 + $0x7c] sm:$0xf]
    %v874 = vld [vmem:[%s4] sm:$0x1]
    %v876 = vlaneseq
    %v877 = vshrl.u32 %v876, 7
    %v878 = vsub.s32 0, %v877
    %v879 = vrot.slane %v874, %v878
    %v913 = vunpack.c.l.b16 %v842
    %v914 = vunpack.c.l.b16 %v843
    %v915 = vunpack.c.l.b16 %v844
    %v916 = vunpack.c.l.b16 %v845
    %v917 = vunpack.c.l.b16 %v846
    %v918 = vunpack.c.l.b16 %v847
    %v919 = vunpack.c.l.b16 %v848
    %v920 = vunpack.c.l.b16 %v849
    %v921 = vunpack.c.l.b16 %v850
    %v922 = vunpack.c.l.b16 %v851
    %v923 = vunpack.c.l.b16 %v852
    %v924 = vunpack.c.l.b16 %v853
    %v925 = vunpack.c.l.b16 %v854
    %v926 = vunpack.c.l.b16 %v855
    %v927 = vunpack.c.l.b16 %v856
    %v928 = vunpack.c.l.b16 %v857
    %v929 = vunpack.c.l.b16 %v858
    %v930 = vunpack.c.l.b16 %v859
    %v931 = vunpack.c.l.b16 %v860
    %v932 = vunpack.c.l.b16 %v861
    %v933 = vunpack.c.l.b16 %v862
    %v934 = vunpack.c.l.b16 %v863
    %v935 = vunpack.c.l.b16 %v864
    %v936 = vunpack.c.l.b16 %v865
    %v937 = vunpack.c.l.b16 %v866
    %v938 = vunpack.c.l.b16 %v867
    %v939 = vunpack.c.l.b16 %v868
    %v940 = vunpack.c.l.b16 %v869
    %v941 = vunpack.c.l.b16 %v870
    %v942 = vunpack.c.l.b16 %v871
    %v943 = vunpack.c.l.b16 %v872
    %v944 = vunpack.c.l.b16 %v873
    %v945 = vpack.c.b16 %v914, %v913
    %v946 = vpack.c.b16 %v916, %v915
    %v947 = vpack.c.b16 %v918, %v917
    %v948 = vpack.c.b16 %v920, %v919
    %v949 = vpack.c.b16 %v922, %v921
    %v950 = vpack.c.b16 %v924, %v923
    %v951 = vpack.c.b16 %v926, %v925
    %v952 = vpack.c.b16 %v928, %v927
    %v953 = vpack.c.b16 %v930, %v929
    %v954 = vpack.c.b16 %v932, %v931
    %v955 = vpack.c.b16 %v934, %v933
    %v956 = vpack.c.b16 %v936, %v935
    %v957 = vpack.c.b16 %v938, %v937
    %v958 = vpack.c.b16 %v940, %v939
    %v959 = vpack.c.b16 %v942, %v941
    %v960 = vpack.c.b16 %v944, %v943
    %977 = vmatprep.subr.bf16.mxu0 0
    %978 = vmatpush1.bf16.msra.mxu0 %v945
    %979 = vmatprep.subr.bf16.mxu0 0
    %980 = vmatpush1.bf16.msra.mxu0 %v946
    %981 = vmatprep.subr.bf16.mxu0 0
    %982 = vmatpush1.bf16.msra.mxu0 %v947
    %983 = vmatprep.subr.bf16.mxu0 0
    %984 = vmatpush1.bf16.msra.mxu0 %v948
    %985 = vmatprep.subr.bf16.mxu0 0
    %986 = vmatpush1.bf16.msra.mxu0 %v949
    %987 = vmatprep.subr.bf16.mxu0 0
    %988 = vmatpush1.bf16.msra.mxu0 %v950
    %989 = vmatprep.subr.bf16.mxu0 0
    %990 = vmatpush1.bf16.msra.mxu0 %v951
    %991 = vmatprep.subr.bf16.mxu0 0
    %992 = vmatpush1.bf16.msra.mxu0 %v952
    %993 = vmatprep.subr.bf16.mxu0 0
    %994 = vmatpush1.bf16.msra.mxu0 %v953
    %995 = vmatprep.subr.bf16.mxu0 0
    %996 = vmatpush1.bf16.msra.mxu0 %v954
    %997 = vmatprep.subr.bf16.mxu0 0
    %998 = vmatpush1.bf16.msra.mxu0 %v955
    %999 = vmatprep.subr.bf16.mxu0 0
    %1000 = vmatpush1.bf16.msra.mxu0 %v956
    %1001 = vmatprep.subr.bf16.mxu0 0
    %1002 = vmatpush1.bf16.msra.mxu0 %v957
    %1003 = vmatprep.subr.bf16.mxu0 0
    %1004 = vmatpush1.bf16.msra.mxu0 %v958
    %1005 = vmatprep.subr.bf16.mxu0 0
    %1006 = vmatpush1.bf16.msra.mxu0 %v959
    %1007 = vmatprep.subr.bf16.mxu0 0
    %1008 = vmatpush1.bf16.msra.mxu0 %v960
    %1009 = vmatprep.mubr.bf16.mxu0 %v841
    %1010 = vmatmul.mubr.bf16.gmra.mrb[0].mxu0 %v840
    %v1011 = vpop.f32.mrb[0].mxu0
    %v1012 = vadd.f32 %v879, %v1011
    %v1013 = vpop.f32.mrb[0].mxu0
    %v1014 = vpop.f32.mrb[0].mxu0
    %v1015 = vadd.f32 %v879, %v1014
    %v1016 = vpop.f32.mrb[0].mxu0
    %1017 = vdwg.mxu0
    %v1018 = vmul.f32 %v1012, 0.01
    %v1019 = vmul.f32 %v1015, 0.01
    %v1020 = vmax.f32 %v1012, %v1018
    %v1021 = vmax.f32 %v1015, %v1019
    %vm1022 = vcmask 523264
    %v1023 = vsel %vm1022, %v1020, -inf
    %1024 = vmax.xlane.f32.xlu0 %v1023
    %v1025 = vpop.xlane.xlu0 %1024
    %v1026 = vsel %vm1022, %v1021, -inf
    %1027 = vmax.xlane.f32.xlu0 %v1026
    %v1028 = vpop.xlane.xlu0 %1027
    %v1029 = vsub.f32 %v1020, %v1025
    %v1030 = vsub.f32 %v1021, %v1028
    %v1031 = vmul.f32 %v1029, 1.442695
    %v1032 = vpow.pop %v1031
    %v1033 = vmul.f32 %v1030, 1.442695
    %v1034 = vpow.pop %v1033
    %v1035 = vsel %vm1022, %v1032, 0.0
    %1036 = vadd.xlane.f32.xlu0 %v1035
    %v1037 = vpop.xlane.xlu0 %1036
    %v1038 = vsel %vm1022, %v1034, 0.0
    %1039 = vadd.xlane.f32.xlu0 %v1038
    %v1040 = vpop.xlane.xlu0 %1039
    %v1041 = vlog2.pop %v1037
    %v1042 = vmul.f32 %v1041, 0.6931472
    %v1043 = vlog2.pop %v1040
    %v1044 = vmul.f32 %v1043, 0.6931472
    %v1045 = vsub.f32 %v1029, %v1042
    %v1046 = vsub.f32 %v1030, %v1044
    %1047 = vst.msk [vmem:[%s5] sm:$0xff] %vm1022, %v1045
    %1048 = vst.msk [vmem:[%s5 + $0x8] sm:$0xff] %vm1022, %v1046
    // Predicated region
    $region26: #{mlp_forward.1} parent=1 // pred_check
      _
    $region27: #{mlp_forward.1} parent=1 // pred_check_branch
      %1050 = sbr.rel (0) target = $region29
    $region28: #{mlp_forward.1} parent=1 // pred_region
      _
    $region29: #{mlp_forward.1} parent=1 // pred_fallthru
      _
    // Predicated region
    $region30: #{mlp_forward.1} parent=1 // pred_check
      _
    $region31: #{mlp_forward.1} parent=1 // pred_check_branch
      %1052 = sbr.rel (0) target = $region33
    $region32: #{mlp_forward.1} parent=1 // pred_region
      _
    $region33: #{mlp_forward.1} parent=1 // pred_fallthru
      _
    %1053 = vsyncpa [#allocation3], 1

</llo_original>
